<compile_context>
chip_gen: v5e
topology: v5e:2x2
jax: 0.10.0
libtpu: 0.0.40
codegen_flags: <defaults>
</compile_context>

<pallas_src>
import functools

import jax
import jax.numpy as jnp
from jax.experimental import pallas as pl
from jax.experimental.pallas import tpu as pltpu


# ---------------------------------------------------------------------------
# Kernels
# ---------------------------------------------------------------------------
def _sdpa_compute(q, k, v, mask, inv_temperature, out_dtype, attn_dtype):
    # q: (TQ, Dk)  k: (Lk, Dk)  v: (Lk, Dv)  mask: (TQ, Lk) int8 or None
    s = jax.lax.dot_general(q * inv_temperature, k, (((1,), (1,)), ((), ())),
                            preferred_element_type=jnp.float32)          # (TQ, Lk)
    if mask is not None:
        s = jnp.where(mask != 0, jnp.float32(-1e9), s)                   # masked_fill

    # numerically-stable softmax along keys; reciprocal on EUP instead of a wide divide
    m = jnp.max(s, axis=-1, keepdims=True)
    e = jnp.exp(s - m)
    denom = jnp.sum(e, axis=-1, keepdims=True)
    p = e * pl.reciprocal(denom, approx=False)

    o = jnp.dot(p.astype(v.dtype), v, preferred_element_type=jnp.float32)  # (TQ, Dv)
    return p.astype(attn_dtype), o.astype(out_dtype)


def _sdpa_kernel_masked(q_ref, k_ref, v_ref, m_ref, o_ref, attn_ref, *, inv_temperature):
    p, o = _sdpa_compute(q_ref[0], k_ref[0], v_ref[0], m_ref[0],
                         inv_temperature, o_ref.dtype, attn_ref.dtype)
    attn_ref[0] = p
    o_ref[0] = o


def _sdpa_kernel_nomask(q_ref, k_ref, v_ref, o_ref, attn_ref, *, inv_temperature):
    p, o = _sdpa_compute(q_ref[0], k_ref[0], v_ref[0], None,
                         inv_temperature, o_ref.dtype, attn_ref.dtype)
    attn_ref[0] = p
    o_ref[0] = o


# ---------------------------------------------------------------------------
# Wrapper
# ---------------------------------------------------------------------------
def _vmem_capacity_bytes():
    try:
        info = pltpu.get_tpu_info()
        return int(getattr(info, "vmem_capacity_bytes", 64 * 1024 * 1024))
    except Exception:
        return 64 * 1024 * 1024


def scaled_dot_product_attention(q, k, v, temperature, mask=None, *, tile_q=None):
    """q, k: (B, H, Lq/Lk, Dk); v: (B, H, Lk, Dv). Returns (output, attn) like the module.

    mask (optional): broadcastable to (B, H, Lq, Lk); positions where mask == 1 are
    filled with -1e9 before the softmax (same semantics as torch.masked_fill).
    """
    B, H, Lq, Dk = q.shape
    Lk, Dv = v.shape[2], v.shape[3]
    BH = B * H

    # --- chip-adaptive tiling / scoped-VMEM budget -------------------------
    vmem_cap = _vmem_capacity_bytes()
    if tile_q is None:
        tile_q = 512 if vmem_cap >= 128 * 1024 * 1024 else 256   # v5e/v6e vs v7x
    vmem_limit = min(int(vmem_cap * 5 // 8), 96 * 1024 * 1024)   # 80 MiB v5e/v6e, 40 MiB v7x

    qf = q.reshape(BH, Lq, Dk)
    kf = k.reshape(BH, Lk, Dk)
    vf = v.reshape(BH, Lk, Dv)

    # Query tiling: one full-extent tile if it fits, else tile_q + pad.
    if Lq <= tile_q:
        tq, lq_p = Lq, Lq
    else:
        assert tile_q % 16 == 0, "tile_q must be a multiple of 16 (bf16 sublane pack)"
        tq = tile_q
        lq_p = pl.cdiv(Lq, tq) * tq
    pad = lq_p - Lq
    if pad:
        qf = jnp.pad(qf, ((0, 0), (0, pad), (0, 0)))

    grid = (BH, lq_p // tq)

    q_spec = pl.BlockSpec((1, tq, Dk), lambda b, i: (b, i, 0))
    k_spec = pl.BlockSpec((1, Lk, Dk), lambda b, i: (b, 0, 0))   # full K for head b
    v_spec = pl.BlockSpec((1, Lk, Dv), lambda b, i: (b, 0, 0))   # full V for head b
    out_specs = [
        pl.BlockSpec((1, tq, Dv), lambda b, i: (b, i, 0)),       # output
        pl.BlockSpec((1, tq, Lk), lambda b, i: (b, i, 0)),       # attention matrix
    ]
    out_shape = (jax.ShapeDtypeStruct((BH, lq_p, Dv), q.dtype),
                 jax.ShapeDtypeStruct((BH, lq_p, Lk), q.dtype))
    cparams = pltpu.CompilerParams(
        dimension_semantics=("parallel", "parallel"),
        vmem_limit_bytes=vmem_limit,
    )
    inv_t = 1.0 / float(temperature)

    if mask is None:
        # Specialized path: no mask input at all (no zero-mask HBM stream).
        out, attn = pl.pallas_call(
            functools.partial(_sdpa_kernel_nomask, inv_temperature=inv_t),
            out_shape=out_shape,
            grid_spec=pltpu.PrefetchScalarGridSpec(
                num_scalar_prefetch=0,
                grid=grid,
                in_specs=[q_spec, k_spec, v_spec],
                out_specs=out_specs,
            ),
            compiler_params=cparams,
        )(qf, kf, vf)
    else:
        # Keep the mask as small as its true broadcast rank allows; int8 only.
        mB, mH = mask.shape[0], mask.shape[1]
        m4 = jnp.broadcast_to(mask.astype(jnp.int8), (mB, mH, Lq, Lk))
        if mB == 1 and mH == 1:
            mf = m4.reshape(1, Lq, Lk)                       # shared over batch & head
            m_index = lambda b, i: (0, i, 0)
        elif mH == 1:
            mf = m4.reshape(mB, Lq, Lk)                      # per-batch, shared over heads
            m_index = lambda b, i: (b // H, i, 0)
        else:
            m4 = jnp.broadcast_to(m4, (B, H, Lq, Lk))        # truly per-(batch, head)
            mf = m4.reshape(BH, Lq, Lk)
            m_index = lambda b, i: (b, i, 0)
        if pad:
            mf = jnp.pad(mf, ((0, 0), (0, pad), (0, 0)))     # padded rows: unmasked, sliced off
        m_spec = pl.BlockSpec((1, tq, Lk), m_index)

        out, attn = pl.pallas_call(
            functools.partial(_sdpa_kernel_masked, inv_temperature=inv_t),
            out_shape=out_shape,
            grid_spec=pltpu.PrefetchScalarGridSpec(
                num_scalar_prefetch=0,
                grid=grid,
                in_specs=[q_spec, k_spec, v_spec, m_spec],
                out_specs=out_specs,
            ),
            compiler_params=cparams,
        )(qf, kf, vf, mf)

    out = out[:, :Lq].reshape(B, H, Lq, Dv)
    attn = attn[:, :Lq].reshape(B, H, Lq, Lk)
    return out, attn


# ---------------------------------------------------------------------------
# Pure-JAX reference + self-test
# ---------------------------------------------------------------------------
def sdpa_reference(q, k, v, temperature, mask=None):
    attn = jnp.einsum("bhqd,bhkd->bhqk", q / temperature, k)
    if mask is not None:
        attn = jnp.where(mask == 1, -1e9, attn)
    attn = jax.nn.softmax(attn, axis=-1)
    out = jnp.einsum("bhqk,bhkd->bhqd", attn, v)
    return out, attn


def _check(name, got, want, atol=2e-5, rtol=2e-5):
    assert jnp.allclose(got, want, atol=atol, rtol=rtol), f"mismatch: {name}"


if __name__ == "__main__":
    batch, n_head, seq, d_k, d_v = 2, 2, 16, 32, 32
    temperature = d_k ** 0.5

    key = jax.random.PRNGKey(0)
    kq, kk, kv, km = jax.random.split(key, 4)
    q = jax.random.normal(kq, (batch, n_head, seq, d_k), dtype=jnp.float32)
    k = jax.random.normal(kk, (batch, n_head, seq, d_k), dtype=jnp.float32)
    v = jax.random.normal(kv, (batch, n_head, seq, d_v), dtype=jnp.float32)

    # 1) shared causal-style mask (1, 1, L, L): 1 == masked position
    mask_shared = jnp.triu(jnp.ones((seq, seq), jnp.int32), k=1)[None, None, :, :]
    out, attn = scaled_dot_product_attention(q, k, v, temperature, mask_shared)
    out, attn = jax.block_until_ready((out, attn))
    out_r, attn_r = sdpa_reference(q, k, v, temperature, mask_shared)
    assert out.shape == (batch, n_head, seq, d_v)
    assert attn.shape == (batch, n_head, seq, seq)
    _check("out (shared mask)", out, out_r)
    _check("attn (shared mask)", attn, attn_r)

    # 2) no mask (specialized kernel, no mask DMA at all)
    out2, attn2 = scaled_dot_product_attention(q, k, v, temperature, None)
    out2, attn2 = jax.block_until_ready((out2, attn2))
    out2_r, attn2_r = sdpa_reference(q, k, v, temperature, None)
    _check("out (no mask)", out2, out2_r)
    _check("attn (no mask)", attn2, attn2_r)

    # 3) per-batch mask (B, 1, L, L) -> exercises the b // H index_map path
    mask_b = (jax.random.uniform(km, (batch, 1, seq, seq)) < 0.3).astype(jnp.int32)
    out3, attn3 = scaled_dot_product_attention(q, k, v, temperature, mask_b)
    out3, attn3 = jax.block_until_ready((out3, attn3))
    out3_r, attn3_r = sdpa_reference(q, k, v, temperature, mask_b)
    _check("out (per-batch mask)", out3, out3_r)
    _check("attn (per-batch mask)", attn3, attn3_r)

    # 4) fully per-(batch, head) mask (B, H, L, L)
    mask_bh = jnp.broadcast_to(mask_b, (batch, n_head, seq, seq))
    out4, attn4 = scaled_dot_product_attention(q, k, v, temperature, mask_bh)
    out4, attn4 = jax.block_until_ready((out4, attn4))
    out4_r, attn4_r = sdpa_reference(q, k, v, temperature, mask_bh)
    _check("out (per-head mask)", out4, out4_r)
    _check("attn (per-head mask)", attn4, attn4_r)

    print("KERNEL_OK")
</pallas_src>

<mosaic_0001>
module attributes {stable_mosaic.version = 11 : i64} {
  func.func @_sdpa_kernel_masked(%arg0: i32, %arg1: i32, %arg2: memref<1x16x32xf32, #tpu.memory_space<vmem>>, %arg3: memref<1x16x32xf32, #tpu.memory_space<vmem>>, %arg4: memref<1x16x32xf32, #tpu.memory_space<vmem>>, %arg5: memref<1x16x16xi8, #tpu.memory_space<vmem>>, %arg6: memref<1x16x32xf32, #tpu.memory_space<vmem>>, %arg7: memref<1x16x16xf32, #tpu.memory_space<vmem>>) attributes {dimension_semantics = [#tpu.dimension_semantics<parallel>, #tpu.dimension_semantics<parallel>], iteration_bounds = array<i64: 4, 1>, scalar_prefetch = 0 : i64, scratch_operands = 0 : i64, tpu.core_type = #tpu.core_type<tc>, window_params = [{transform_indices = @transform_0, window_bounds = array<i64: 1, 16, 32>}, {transform_indices = @transform_1, window_bounds = array<i64: 1, 16, 32>}, {transform_indices = @transform_2, window_bounds = array<i64: 1, 16, 32>}, {transform_indices = @transform_3, window_bounds = array<i64: 1, 16, 16>}, {transform_indices = @transform_4, window_bounds = array<i64: 1, 16, 32>}, {transform_indices = @transform_5, window_bounds = array<i64: 1, 16, 16>}]} {
    %c0 = arith.constant 0 : index
    %c0_0 = arith.constant 0 : index
    %c0_1 = arith.constant 0 : index
    %0 = vector.load %arg2[%c0, %c0_0, %c0_1] : memref<1x16x32xf32, #tpu.memory_space<vmem>>, vector<1x16x32xf32>
    %1 = vector.shape_cast %0 : vector<1x16x32xf32> to vector<16x32xf32>
    %c0_2 = arith.constant 0 : index
    %c0_3 = arith.constant 0 : index
    %c0_4 = arith.constant 0 : index
    %2 = vector.load %arg3[%c0_2, %c0_3, %c0_4] : memref<1x16x32xf32, #tpu.memory_space<vmem>>, vector<1x16x32xf32>
    %3 = vector.shape_cast %2 : vector<1x16x32xf32> to vector<16x32xf32>
    %c0_5 = arith.constant 0 : index
    %c0_6 = arith.constant 0 : index
    %c0_7 = arith.constant 0 : index
    %4 = vector.load %arg4[%c0_5, %c0_6, %c0_7] : memref<1x16x32xf32, #tpu.memory_space<vmem>>, vector<1x16x32xf32>
    %5 = vector.shape_cast %4 : vector<1x16x32xf32> to vector<16x32xf32>
    %c0_8 = arith.constant 0 : index
    %c0_9 = arith.constant 0 : index
    %c0_10 = arith.constant 0 : index
    %6 = vector.load %arg5[%c0_8, %c0_9, %c0_10] : memref<1x16x16xi8, #tpu.memory_space<vmem>>, vector<1x16x16xi8>
    %7 = vector.shape_cast %6 : vector<1x16x16xi8> to vector<16x16xi8>
    %cst = arith.constant 0.176776692 : f32
    %8 = vector.broadcast %cst : f32 to vector<16x32xf32>
    %9 = arith.mulf %1, %8 : vector<16x32xf32>
    %cst_11 = arith.constant dense<0.000000e+00> : vector<16x16xf32>
    %10 = tpu.matmul %9, %3, %cst_11 {dimension_numbers = #tpu.dot_dimension_numbers<[1], [1], [0], [0], [0, 0, 1, 0], [], []>} : vector<16x32xf32>, vector<16x32xf32>, vector<16x16xf32> -> vector<16x16xf32>
    %c0_i8 = arith.constant 0 : i8
    %11 = vector.broadcast %c0_i8 : i8 to vector<16x16xi8>
    %12 = arith.cmpi ne, %7, %11 : vector<16x16xi8>
    %cst_12 = arith.constant -1.000000e+09 : f32
    %13 = vector.broadcast %cst_12 : f32 to vector<16x16xf32>
    %14 = arith.select %12, %13, %10 : vector<16x16xi1>, vector<16x16xf32>
    %cst_13 = arith.constant dense<0xFF800000> : vector<16xf32>
    %15 = vector.multi_reduction <maximumf>, %14, %cst_13 [1] : vector<16x16xf32> to vector<16xf32>
    %16 = vector.shape_cast %15 : vector<16xf32> to vector<16x1xf32>
    %17 = vector.broadcast %16 : vector<16x1xf32> to vector<16x16xf32>
    %18 = arith.subf %14, %17 : vector<16x16xf32>
    %19 = math.exp %18 : vector<16x16xf32>
    %cst_14 = arith.constant dense<0.000000e+00> : vector<16xf32>
    %20 = vector.multi_reduction <add>, %19, %cst_14 [1] : vector<16x16xf32> to vector<16xf32>
    %21 = vector.shape_cast %20 : vector<16xf32> to vector<16x1xf32>
    %22 = tpu.reciprocal %21 : vector<16x1xf32> -> vector<16x1xf32>
    %23 = vector.broadcast %22 : vector<16x1xf32> to vector<16x16xf32>
    %24 = arith.mulf %19, %23 : vector<16x16xf32>
    %cst_15 = arith.constant dense<0.000000e+00> : vector<16x32xf32>
    %25 = tpu.matmul %24, %5, %cst_15 {dimension_numbers = #tpu.dot_dimension_numbers<[1], [0], [0], [1], [0, 0, 1, 1], [], []>} : vector<16x16xf32>, vector<16x32xf32>, vector<16x32xf32> -> vector<16x32xf32>
    %c0_16 = arith.constant 0 : index
    %c0_17 = arith.constant 0 : index
    %c0_18 = arith.constant 0 : index
    %26 = vector.load %arg7[%c0_16, %c0_17, %c0_18] : memref<1x16x16xf32, #tpu.memory_space<vmem>>, vector<1x16x16xf32>
    %27 = vector.shape_cast %26 : vector<1x16x16xf32> to vector<16x16xf32>
    %28 = vector.shape_cast %24 : vector<16x16xf32> to vector<1x16x16xf32>
    tpu.vector_store %arg7[%c0_16, %c0_17, %c0_18], %28 {strides = array<i32>} : memref<1x16x16xf32, #tpu.memory_space<vmem>>, vector<1x16x16xf32>,
    %c0_19 = arith.constant 0 : index
    %c0_20 = arith.constant 0 : index
    %c0_21 = arith.constant 0 : index
    %29 = vector.load %arg6[%c0_19, %c0_20, %c0_21] : memref<1x16x32xf32, #tpu.memory_space<vmem>>, vector<1x16x32xf32>
    %30 = vector.shape_cast %29 : vector<1x16x32xf32> to vector<16x32xf32>
    %31 = vector.shape_cast %25 : vector<16x32xf32> to vector<1x16x32xf32>
    tpu.vector_store %arg6[%c0_19, %c0_20, %c0_21], %31 {strides = array<i32>} : memref<1x16x32xf32, #tpu.memory_space<vmem>>, vector<1x16x32xf32>,
    return
  }
  func.func @transform_0(%arg0: i32, %arg1: i32) -> (i32, i32, i32) {
    %c0_i32 = arith.constant 0 : i32
    %c0_i32_0 = arith.constant 0 : i32
    return %arg0, %arg1, %c0_i32 : i32, i32, i32
  }
  func.func @transform_1(%arg0: i32, %arg1: i32) -> (i32, i32, i32) {
    %c0_i32 = arith.constant 0 : i32
    %c0_i32_0 = arith.constant 0 : i32
    %c0_i32_1 = arith.constant 0 : i32
    return %arg0, %c0_i32, %c0_i32_0 : i32, i32, i32
  }
  func.func @transform_2(%arg0: i32, %arg1: i32) -> (i32, i32, i32) {
    %c0_i32 = arith.constant 0 : i32
    %c0_i32_0 = arith.constant 0 : i32
    %c0_i32_1 = arith.constant 0 : i32
    return %arg0, %c0_i32, %c0_i32_0 : i32, i32, i32
  }
  func.func @transform_3(%arg0: i32, %arg1: i32) -> (i32, i32, i32) {
    %c0_i32 = arith.constant 0 : i32
    %c0_i32_0 = arith.constant 0 : i32
    %c0_i32_1 = arith.constant 0 : i32
    return %c0_i32, %arg1, %c0_i32_0 : i32, i32, i32
  }
  func.func @transform_4(%arg0: i32, %arg1: i32) -> (i32, i32, i32) {
    %c0_i32 = arith.constant 0 : i32
    %c0_i32_0 = arith.constant 0 : i32
    return %arg0, %arg1, %c0_i32 : i32, i32, i32
  }
  func.func @transform_5(%arg0: i32, %arg1: i32) -> (i32, i32, i32) {
    %c0_i32 = arith.constant 0 : i32
    %c0_i32_0 = arith.constant 0 : i32
    return %arg0, %arg1, %c0_i32 : i32, i32, i32
  }
}

</mosaic_0001>

<llo_original>
// kernel: tpu_custom_call.1
$region0: #{tpu_custom_call.1}
  #allocation0 [shape = 'u32[]', space=smem, size = 0x4, offset = 0x4, fixed_abs, tag = 'smem constant byte address 0x4 - core index']
  #allocation1 [shape = 'u32[72,128]{1,0:T(1,128)}', space=vmem, size = 0x9000, scoped, tag = 'internal scratch']
  %s0 = inlined_call_operand.hbm [shape: f32[4,16,32], index: 0, kind: input, shape index: {}]
  %s1 = inlined_call_operand.hbm [shape: f32[4,16,32], index: 1, kind: input, shape index: {}]
  %s2 = inlined_call_operand.hbm [shape: f32[4,16,32], index: 2, kind: input, shape index: {}]
  %s3 = inlined_call_operand.hbm [shape: s8[1,16,16], index: 3, kind: input, shape index: {}]
  %s4 = inlined_call_operand.hbm [shape: f32[4,16,32], index: 4, kind: output, shape index: {0}]
  %s5 = inlined_call_operand.hbm [shape: f32[4,16,16], index: 5, kind: output, shape index: {1}]
  %6 = xla_tuple %s4, %s5
  %s7 = sld [smem:[#allocation0]]
  $region73: #{tpu_custom_call.1} parent=0
    _
  %s9 = ssub.s32 1, %s7
  %s10 = scalar_select 0, %s9, %s7
  $region1: #{tpu_custom_call.1} parent=0
    #allocation2 [shape = 'u8[16384]{0}', space=vmem, size = 0x4000, scoped, tag = 'input window, operand 0']
    #allocation3 [shape = 's32[2]{0}', space=sflag, size = 0x8, scoped, tag = 'scoped memory for tpu_custom_call.1']
    #allocation4 [shape = 's32[2]{0}', space=sflag, size = 0x8, scoped, tag = 'scoped memory for tpu_custom_call.1']
    #allocation5 [shape = 'u8[16384]{0}', space=vmem, size = 0x4000, scoped, tag = 'input window, operand 1']
    #allocation6 [shape = 's32[2]{0}', space=sflag, size = 0x8, scoped, tag = 'scoped memory for tpu_custom_call.1']
    #allocation7 [shape = 'u8[16384]{0}', space=vmem, size = 0x4000, scoped, tag = 'input window, operand 2']
    #allocation8 [shape = 'u8[2048]{0}', space=vmem, size = 0x800, scoped, tag = 'input window, operand 3, single buffered']
    #allocation9 [shape = 's32[1]{0}', space=sflag, size = 0x4, scoped, tag = 'scoped memory for tpu_custom_call.1']
    #allocation10 [shape = 'u8[16384]{0}', space=vmem, size = 0x4000, scoped, tag = 'output window, operand 0']
    #allocation11 [shape = 'u8[16384]{0}', space=vmem, size = 0x4000, scoped, tag = 'output window, operand 1']
    #allocation12 [shape = 's32[2]{0}', space=sflag, size = 0x8, scoped, tag = 'scoped memory for tpu_custom_call.1']
    %11 = vsyncpa [#allocation3], 0
    %s12 = scalar_lea.sflag [#allocation3], 1
    %13 = vsyncpa %s12, 0
    %14 = vsyncpa [#allocation6], 0
    %s15 = scalar_lea.sflag [#allocation6], 1
    %16 = vsyncpa %s15, 0
    %17 = vsyncpa [#allocation9], 0
    %18 = vsyncpa [#allocation4], 0
    %s19 = scalar_lea.sflag [#allocation4], 1
    %20 = vsyncpa %s19, 0
    %21 = vsyncpa [#allocation12], 0
    %s22 = scalar_lea.sflag [#allocation12], 1
    %23 = vsyncpa %s22, 0
    loop: start=0, step=1, limit=6
    $region2: #{tpu_custom_call.1} parent=1 // loop_pre_header
      _
    $region3: #{tpu_custom_call.1} parent=1 // loop_header
      %s25 = sphi 0, %s29
      %p26 = scmp.ge.s32.totalorder %s25, 6
      %s32 = sphi 0, %s44
      %s33 = sphi 0, %s40
      %s34 = sphi 0, %s32
      %s35 = sphi 0, %s33
      %s36 = sphi 0, %s34
      %s37 = sphi 0, %s35
      %s49 = sphi 0, %s51
      %s52 = sphi 0, %s49
      %s53 = sphi 0, %s52
      %s69 = sphi 0, %s53
      %s75 = sphi 0, %s77
      %s78 = sphi 0, %s75
      %s79 = sphi 0, %s78
      %s95 = sphi 0, %s79
      %s101 = sphi 0, %s103
      %s104 = sphi 0, %s101
      %s105 = sphi 0, %s104
      %s121 = sphi 0, %s105
      %s127 = sphi 0, %s129
      %s130 = sphi 0, %s127
      %s131 = sphi 0, %s130
      %s147 = sphi 0, %s131
      %s155 = sphi 0, %s157
      %s158 = sphi 0, %s155
      %s159 = sphi 0, %s158
      %s175 = sphi 0, %s159
      %s183 = sphi 0, %s185
      %s186 = sphi 0, %s183
      %s187 = sphi 0, %s186
      %s203 = sphi 0, %s187
    $region4: #{tpu_custom_call.1} parent=1 // loop_header_branch
      %28 = sbr.rel (%p26) target = $region8
    $region5: #{tpu_custom_call.1} parent=1 // loop_body
      %s30 = ssub.s32 %s25, 1
      %s31 = ssub.s32 %s25, 2
      %s38 = sadd.s32 1, %s33
      %p39 = scmp.ge.s32.totalorder %s38, 1
      %s40 = scalar_select %p39, 0, %s38
      %s41 = sadd.s32 1, %s32
      %s42 = scalar_select %p39, %s41, %s32
      %p43 = scmp.ge.s32.totalorder %s42, 4
      %s44 = scalar_select %p43, 0, %s42
      %s45 = ssub.s32 %s32, %s44
      %s46 = ssub.s32 %s33, %s40
      %s47 = sor.u32 %s45, %s46
      %p48 = scmp.eq.s32.totalorder %s47, 0
      %s50 = sadd.s32 %s49, 1
      %s51 = scalar_select %p48, %s49, %s50
      %p54 = pneg %p48
      %p55 = scmp.eq.s32.totalorder %s25, 3
      %p56 = por %p54, %p55
      %p57 = scmp.ne.s32.totalorder %s49, %s52
      %p58 = scmp.eq.s32.totalorder %s25, 0
      %p59 = por %p57, %p58
      %p60 = scmp.ne.s32.totalorder %s49, %s52
      %p61 = scmp.eq.s32.totalorder %s30, 3
      %p62 = por %p60, %p61
      %p63 = scmp.ne.s32.totalorder %s52, %s53
      %p64 = scmp.eq.s32.totalorder %s30, 0
      %p65 = por %p63, %p64
      %p66 = scmp.ne.s32.totalorder %s52, %s53
      %p67 = scmp.eq.s32.totalorder %s31, 3
      %p68 = por %p66, %p67
      %p70 = scmp.ne.s32.totalorder %s53, %s69
      %p71 = scmp.eq.s32.totalorder %s31, 0
      %p72 = por %p70, %p71
      %s73 = ssub.s32 %s32, %s44
      %p74 = scmp.eq.s32.totalorder %s73, 0
      %s76 = sadd.s32 %s75, 1
      %s77 = scalar_select %p74, %s75, %s76
      %p80 = pneg %p74
      %p81 = scmp.eq.s32.totalorder %s25, 3
      %p82 = por %p80, %p81
      %p83 = scmp.ne.s32.totalorder %s75, %s78
      %p84 = scmp.eq.s32.totalorder %s25, 0
      %p85 = por %p83, %p84
      %p86 = scmp.ne.s32.totalorder %s75, %s78
      %p87 = scmp.eq.s32.totalorder %s30, 3
      %p88 = por %p86, %p87
      %p89 = scmp.ne.s32.totalorder %s78, %s79
      %p90 = scmp.eq.s32.totalorder %s30, 0
      %p91 = por %p89, %p90
      %p92 = scmp.ne.s32.totalorder %s78, %s79
      %p93 = scmp.eq.s32.totalorder %s31, 3
      %p94 = por %p92, %p93
      %p96 = scmp.ne.s32.totalorder %s79, %s95
      %p97 = scmp.eq.s32.totalorder %s31, 0
      %p98 = por %p96, %p97
      %s99 = ssub.s32 %s32, %s44
      %p100 = scmp.eq.s32.totalorder %s99, 0
      %s102 = sadd.s32 %s101, 1
      %s103 = scalar_select %p100, %s101, %s102
      %p106 = pneg %p100
      %p107 = scmp.eq.s32.totalorder %s25, 3
      %p108 = por %p106, %p107
      %p109 = scmp.ne.s32.totalorder %s101, %s104
      %p110 = scmp.eq.s32.totalorder %s25, 0
      %p111 = por %p109, %p110
      %p112 = scmp.ne.s32.totalorder %s101, %s104
      %p113 = scmp.eq.s32.totalorder %s30, 3
      %p114 = por %p112, %p113
      %p115 = scmp.ne.s32.totalorder %s104, %s105
      %p116 = scmp.eq.s32.totalorder %s30, 0
      %p117 = por %p115, %p116
      %p118 = scmp.ne.s32.totalorder %s104, %s105
      %p119 = scmp.eq.s32.totalorder %s31, 3
      %p120 = por %p118, %p119
      %p122 = scmp.ne.s32.totalorder %s105, %s121
      %p123 = scmp.eq.s32.totalorder %s31, 0
      %p124 = por %p122, %p123
      %s125 = ssub.s32 %s33, %s40
      %p126 = scmp.eq.s32.totalorder %s125, 0
      %s128 = sadd.s32 %s127, 1
      %s129 = scalar_select %p126, %s127, %s128
      %p132 = pneg %p126
      %p133 = scmp.eq.s32.totalorder %s25, 3
      %p134 = por %p132, %p133
      %p135 = scmp.ne.s32.totalorder %s127, %s130
      %p136 = scmp.eq.s32.totalorder %s25, 0
      %p137 = por %p135, %p136
      %p138 = scmp.ne.s32.totalorder %s127, %s130
      %p139 = scmp.eq.s32.totalorder %s30, 3
      %p140 = por %p138, %p139
      %p141 = scmp.ne.s32.totalorder %s130, %s131
      %p142 = scmp.eq.s32.totalorder %s30, 0
      %p143 = por %p141, %p142
      %p144 = scmp.ne.s32.totalorder %s130, %s131
      %p145 = scmp.eq.s32.totalorder %s31, 3
      %p146 = por %p144, %p145
      %p148 = scmp.ne.s32.totalorder %s131, %s147
      %p149 = scmp.eq.s32.totalorder %s31, 0
      %p150 = por %p148, %p149
      %s151 = ssub.s32 %s32, %s44
      %s152 = ssub.s32 %s33, %s40
      %s153 = sor.u32 %s151, %s152
      %p154 = scmp.eq.s32.totalorder %s153, 0
      %s156 = sadd.s32 %s155, 1
      %s157 = scalar_select %p154, %s155, %s156
      %p160 = pneg %p154
      %p161 = scmp.eq.s32.totalorder %s25, 3
      %p162 = por %p160, %p161
      %p163 = scmp.ne.s32.totalorder %s155, %s158
      %p164 = scmp.eq.s32.totalorder %s25, 0
      %p165 = por %p163, %p164
      %p166 = scmp.ne.s32.totalorder %s155, %s158
      %p167 = scmp.eq.s32.totalorder %s30, 3
      %p168 = por %p166, %p167
      %p169 = scmp.ne.s32.totalorder %s158, %s159
      %p170 = scmp.eq.s32.totalorder %s30, 0
      %p171 = por %p169, %p170
      %p172 = scmp.ne.s32.totalorder %s158, %s159
      %p173 = scmp.eq.s32.totalorder %s31, 3
      %p174 = por %p172, %p173
      %p176 = scmp.ne.s32.totalorder %s159, %s175
      %p177 = scmp.eq.s32.totalorder %s31, 0
      %p178 = por %p176, %p177
      %s179 = ssub.s32 %s32, %s44
      %s180 = ssub.s32 %s33, %s40
      %s181 = sor.u32 %s179, %s180
      %p182 = scmp.eq.s32.totalorder %s181, 0
      %s184 = sadd.s32 %s183, 1
      %s185 = scalar_select %p182, %s183, %s184
      %p188 = pneg %p182
      %p189 = scmp.eq.s32.totalorder %s25, 3
      %p190 = por %p188, %p189
      %p191 = scmp.ne.s32.totalorder %s183, %s186
      %p192 = scmp.eq.s32.totalorder %s25, 0
      %p193 = por %p191, %p192
      %p194 = scmp.ne.s32.totalorder %s183, %s186
      %p195 = scmp.eq.s32.totalorder %s30, 3
      %p196 = por %p194, %p195
      %p197 = scmp.ne.s32.totalorder %s186, %s187
      %p198 = scmp.eq.s32.totalorder %s30, 0
      %p199 = por %p197, %p198
      %p200 = scmp.ne.s32.totalorder %s186, %s187
      %p201 = scmp.eq.s32.totalorder %s31, 3
      %p202 = por %p200, %p201
      %p204 = scmp.ne.s32.totalorder %s187, %s203
      %p205 = scmp.eq.s32.totalorder %s31, 0
      %p206 = por %p204, %p205
      %p207 = scmp.le.s32.totalorder 1, %s25
      %p208 = scmp.lt.s32.totalorder %s25, 5
      %p209 = pnand %p207, %p208
      %p210 = pneg %p209
      // Predicated region
      $region9: #{tpu_custom_call.1} parent=5 // pred_check
        _
      $region10: #{tpu_custom_call.1} parent=5 // pred_check_branch
        %212 = sbr.rel (%p209) target = $region12
      $region11: #{tpu_custom_call.1} parent=5 // pred_region
        %s213 = ssub.s32 %s25, 1
        // Predicated region
        $region13: #{tpu_custom_call.1} parent=11 // pred_check
          %p214 = pneg %p143
        $region14: #{tpu_custom_call.1} parent=11 // pred_check_branch
          %216 = sbr.rel (%p214) target = $region16
        $region15: #{tpu_custom_call.1} parent=11 // pred_region
          %s217 = smul.u32 2, %s35
          %219 = vsyncadd [#allocation9], 0
          %s220 = smul.addr %s217, 2
          %s221 = scalar_lea.hbm %s3, %s220
          %s222 = sshll.u32 %s221, 4
          %s223 = int_to_ptr.hbm [resolvable:$true] %s222
          %s224 = sshll.u32 [#allocation8], 4
          %s225 = int_to_ptr.vmem [resolvable:$true] %s224
          %230 = dma.hbm_to_vmem [thread:$0]  %s223, 64, %s225, [#allocation9], 32, 32, 2
        $region16: #{tpu_custom_call.1} parent=11 // pred_fallthru
          _
      $region12: #{tpu_custom_call.1} parent=5 // pred_fallthru
        _
      %p231 = scmp.lt.s32.totalorder %s25, 4
      // Predicated region
      $region17: #{tpu_custom_call.1} parent=5 // pred_check
        %p232 = pneg %p231
      $region18: #{tpu_custom_call.1} parent=5 // pred_check_branch
        %234 = sbr.rel (%p232) target = $region20
      $region19: #{tpu_custom_call.1} parent=5 // pred_region
        // Predicated region
        $region21: #{tpu_custom_call.1} parent=19 // pred_check
          %p235 = pneg %p59
        $region22: #{tpu_custom_call.1} parent=19 // pred_check_branch
          %237 = sbr.rel (%p235) target = $region24
        $region23: #{tpu_custom_call.1} parent=19 // pred_region
          %s238 = sand.u32 %s49, 1
          %s239 = scalar_lea.sflag [#allocation3], %s238
          %s240 = sand.u32 %s49, 1
          %s241 = smul.addr %s240, 16
          %s242 = scalar_lea.vmem [#allocation2], %s241
          %s243 = smul.u32 2, %s33
          %245 = vsyncadd %s239, 0
          %s246 = smul.addr %s32, 2
          %s247 = sadd.s32 %s243, %s246
          %s248 = smul.addr %s247, 8
          %s249 = scalar_lea.hbm %s0, %s248
          %s250 = sshll.u32 %s249, 4
          %s251 = int_to_ptr.hbm [resolvable:$true] %s250
          %s252 = sshll.u32 %s242, 4
          %s253 = int_to_ptr.vmem [resolvable:$true] %s252
          %258 = dma.hbm_to_vmem [thread:$0]  %s251, 256, %s253, %s239, 128, 128, 8
        $region24: #{tpu_custom_call.1} parent=19 // pred_fallthru
          _
        // Predicated region
        $region25: #{tpu_custom_call.1} parent=19 // pred_check
          %p259 = pneg %p85
        $region26: #{tpu_custom_call.1} parent=19 // pred_check_branch
          %261 = sbr.rel (%p259) target = $region28
        $region27: #{tpu_custom_call.1} parent=19 // pred_region
          %s262 = sand.u32 %s25, 1
          %s263 = scalar_lea.sflag [#allocation6], %s262
          %s264 = sand.u32 %s75, 1
          %s265 = smul.addr %s264, 16
          %s266 = scalar_lea.vmem [#allocation5], %s265
          %268 = vsyncadd %s263, 0
          %s269 = smul.addr %s32, 2
          %s270 = smul.addr %s269, 8
          %s271 = scalar_lea.hbm %s1, %s270
          %s272 = sshll.u32 %s271, 4
          %s273 = int_to_ptr.hbm [resolvable:$true] %s272
          %s274 = sshll.u32 %s266, 4
          %s275 = int_to_ptr.vmem [resolvable:$true] %s274
          %280 = dma.hbm_to_vmem [thread:$0]  %s273, 256, %s275, %s263, 128, 128, 8
        $region28: #{tpu_custom_call.1} parent=19 // pred_fallthru
          _
        // Predicated region
        $region29: #{tpu_custom_call.1} parent=19 // pred_check
          %p281 = pneg %p111
        $region30: #{tpu_custom_call.1} parent=19 // pred_check_branch
          %283 = sbr.rel (%p281) target = $region32
        $region31: #{tpu_custom_call.1} parent=19 // pred_region
          %s284 = sand.u32 %s25, 1
          %s285 = scalar_lea.sflag [#allocation6], %s284
          %s286 = sand.u32 %s101, 1
          %s287 = smul.addr %s286, 16
          %s288 = scalar_lea.vmem [#allocation7], %s287
          %290 = vsyncadd %s285, 0
          %s291 = smul.addr %s32, 2
          %s292 = smul.addr %s291, 8
          %s293 = scalar_lea.hbm %s2, %s292
          %s294 = sshll.u32 %s293, 4
          %s295 = int_to_ptr.hbm [resolvable:$true] %s294
          %s296 = sshll.u32 %s288, 4
          %s297 = int_to_ptr.vmem [resolvable:$true] %s296
          %302 = dma.hbm_to_vmem [thread:$0]  %s295, 256, %s297, %s285, 128, 128, 8
        $region32: #{tpu_custom_call.1} parent=19 // pred_fallthru
          _
      $region20: #{tpu_custom_call.1} parent=5 // pred_fallthru
        _
      %p303 = scmp.le.s32.totalorder 1, %s25
      %p304 = scmp.lt.s32.totalorder %s25, 5
      %p305 = pnand %p303, %p304
      %p306 = pneg %p305
      // Predicated region
      $region33: #{tpu_custom_call.1} parent=5 // pred_check
        _
      $region34: #{tpu_custom_call.1} parent=5 // pred_check_branch
        %308 = sbr.rel (%p305) target = $region36
      $region35: #{tpu_custom_call.1} parent=5 // pred_region
        %s309 = ssub.s32 %s25, 1
        %s310 = sand.u32 %s52, 1
        %s311 = scalar_lea.sflag [#allocation3], %s310
        %s312 = sand.u32 %s52, 1
        %s313 = smul.addr %s312, 16
        %s314 = scalar_lea.vmem [#allocation2], %s313
        // Predicated region
        $region37: #{tpu_custom_call.1} parent=35 // pred_check
          %p315 = pneg %p65
        $region38: #{tpu_custom_call.1} parent=35 // pred_check_branch
          %317 = sbr.rel (%p315) target = $region40
        $region39: #{tpu_custom_call.1} parent=35 // pred_region
          %319 = dma.done %s311, 256
        $region40: #{tpu_custom_call.1} parent=35 // pred_fallthru
          _
        %s320 = sand.u32 %s30, 1
        %s321 = scalar_lea.sflag [#allocation6], %s320
        %s322 = sand.u32 %s78, 1
        %s323 = smul.addr %s322, 16
        %s324 = scalar_lea.vmem [#allocation5], %s323
        // Predicated region
        $region41: #{tpu_custom_call.1} parent=35 // pred_check
          %p325 = pneg %p91
        $region42: #{tpu_custom_call.1} parent=35 // pred_check_branch
          %327 = sbr.rel (%p325) target = $region44
        $region43: #{tpu_custom_call.1} parent=35 // pred_region
          %329 = dma.done %s321, 256
        $region44: #{tpu_custom_call.1} parent=35 // pred_fallthru
          _
        %s330 = sand.u32 %s30, 1
        %s331 = scalar_lea.sflag [#allocation6], %s330
        %s332 = sand.u32 %s104, 1
        %s333 = smul.addr %s332, 16
        %s334 = scalar_lea.vmem [#allocation7], %s333
        // Predicated region
        $region45: #{tpu_custom_call.1} parent=35 // pred_check
          %p335 = pneg %p117
        $region46: #{tpu_custom_call.1} parent=35 // pred_check_branch
          %337 = sbr.rel (%p335) target = $region48
        $region47: #{tpu_custom_call.1} parent=35 // pred_region
          %339 = dma.done %s331, 256
        $region48: #{tpu_custom_call.1} parent=35 // pred_fallthru
          _
        // Predicated region
        $region49: #{tpu_custom_call.1} parent=35 // pred_check
          %p340 = pneg %p143
        $region50: #{tpu_custom_call.1} parent=35 // pred_check_branch
          %342 = sbr.rel (%p340) target = $region52
        $region51: #{tpu_custom_call.1} parent=35 // pred_region
          %344 = dma.done [#allocation9], 64
        $region52: #{tpu_custom_call.1} parent=35 // pred_fallthru
          _
        %s345 = sand.u32 %s52, 1
        %s346 = scalar_lea.sflag [#allocation3], %s345
        %s347 = sand.u32 %s52, 1
        %s348 = smul.addr %s347, 16
        %s349 = scalar_lea.vmem [#allocation2], %s348
        %p350 = pneg %p65
        %p351 = pneg %p62
        %s352 = sand.u32 %s30, 1
        %s353 = scalar_lea.sflag [#allocation6], %s352
        %s354 = sand.u32 %s78, 1
        %s355 = smul.addr %s354, 16
        %s356 = scalar_lea.vmem [#allocation5], %s355
        %p357 = pneg %p91
        %p358 = pneg %p88
        %s359 = sand.u32 %s30, 1
        %s360 = scalar_lea.sflag [#allocation6], %s359
        %s361 = sand.u32 %s104, 1
        %s362 = smul.addr %s361, 16
        %s363 = scalar_lea.vmem [#allocation7], %s362
        %p364 = pneg %p117
        %p365 = pneg %p114
        %p366 = pneg %p143
        %p367 = pneg %p140
        %p368 = pneg %p171
        %p369 = pneg %p168
        %s370 = sand.u32 %s158, 1
        %s371 = scalar_lea.sflag [#allocation4], %s370
        %s372 = sand.u32 %s158, 1
        %s373 = smul.addr %s372, 16
        %s374 = scalar_lea.vmem [#allocation10], %s373
        %p375 = pneg %p199
        %p376 = pneg %p196
        %s377 = sand.u32 %s186, 1
        %s378 = scalar_lea.sflag [#allocation12], %s377
        %s379 = sand.u32 %s186, 1
        %s380 = smul.addr %s379, 16
        %s381 = scalar_lea.vmem [#allocation11], %s380
        %s382 = smul.u32 2, %s35
        %s383 = smul.u32 2, %s35
        %s384 = smul.u32 2, %s35
        %s385 = smul.u32 2, %s35
        %v388 = vld [vmem:[%s314] sm:$0xff]
        %v389 = vld [vmem:[%s314 + $0x8] sm:$0xff]
        %v390 = vld [vmem:[%s324] sm:$0xff]
        %v391 = vld [vmem:[%s324 + $0x8] sm:$0xff]
        %v392 = vld [vmem:[%s334] sm:$0xff]
        %v393 = vld [vmem:[%s334 + $0x8] sm:$0xff]
        %v394 = vld [vmem:[#allocation8] sm:$0x3]
        %v395 = vld [vmem:[#allocation8 + $0x2] sm:$0x3]
        %v396 = vmul.f32 %v388, 0.17677669
        %v397 = vmul.f32 %v389, 0.17677669
        %vm398 = vcmask 261120
        %v400 = vsel %vm398, %v396, 0
        %v403 = vsel %vm398, %v397, 0
        %v406 = vsel %vm398, %v390, 0
        %v409 = vsel %vm398, %v391, 0
        %411 = vmatpush.xpose.msra.mxu0 0.0
        %412 = vmatpush.xpose.msra.mxu0 0.0
        %413 = vmatpush.xpose.msra.mxu0 0.0
        %414 = vmatpush.xpose.msra.mxu0 0.0
        %415 = vmatpush.xpose.msra.mxu0 0.0
        %416 = vmatpush.xpose.msra.mxu0 0.0
        %417 = vmatpush.xpose.msra.mxu0 0.0
        %418 = vmatpush.xpose.msra.mxu0 0.0
        %419 = vmatpush.xpose.msra.mxu0 0.0
        %420 = vmatpush.xpose.msra.mxu0 0.0
        %421 = vmatpush.xpose.msra.mxu0 0.0
        %422 = vmatpush.xpose.msra.mxu0 0.0
        %423 = vmatpush.xpose.msra.mxu0 0.0
        %424 = vmatpush.xpose.msra.mxu0 0.0
        %425 = vmatpush.xpose.msra.mxu0 %v409
        %426 = vmatpush.xpose.msra.mxu0 %v406
        %427 = vmatmul.f32.gmra.mxu0 %v400
        %v428 = vpop.f32.mrf.mxu0
        %v429 = vadd.f32 0.0, %v428
        %430 = vmatmul.f32.gmra.mxu0 %v403
        %v431 = vpop.f32.mrf.mxu0
        %v432 = vadd.f32 0.0, %v431
        %433 = vdwg.mxu0
        %vm434 = vnez %v394
        %vm435 = vnez %v395
        %v436 = vsel %vm434, 16843009, 0
        %v437 = vsel %vm435, 16843009, 0
        %v438 = vunpack.c.0.s8 %v436
        %v439 = vunpack.c.0.s8 %v437
        %vm440 = vcmp.ne.s32.totalorder %v438, 0
        %vm441 = vcmp.ne.s32.totalorder %v439, 0
        %v442 = vsel %vm440, -1e+09, %v429
        %v443 = vsel %vm441, -1e+09, %v432
        %vm444 = vcmask 130048
        %v445 = vsel %vm444, %v442, -inf
        %446 = vmax.xlane.f32.xlu0 %v445
        %v447 = vpop.xlane.xlu0 %446
        %v448 = vsel %vm444, %v443, -inf
        %449 = vmax.xlane.f32.xlu0 %v448
        %v450 = vpop.xlane.xlu0 %449
        %v451 = vsub.f32 %v442, %v447
        %v452 = vsub.f32 %v443, %v450
        %v453 = vmul.f32 %v451, 1.442695
        %v454 = vpow.pop %v453
        %v455 = vmul.f32 %v452, 1.442695
        %v456 = vpow.pop %v455
        %v457 = vsel %vm444, %v454, 0.0
        %458 = vadd.xlane.f32.xlu0 %v457
        %v459 = vpop.xlane.xlu0 %458
        %v460 = vsel %vm444, %v456, 0.0
        %461 = vadd.xlane.f32.xlu0 %v460
        %v462 = vpop.xlane.xlu0 %461
        %v463 = vrcp.pop %v459
        %v464 = vmul.f32 %v459, %v463
        %v465 = vsub.f32 1.0, %v464
        %v466 = vmul.f32 %v463, %v465
        %v467 = vadd.f32 %v463, %v466
        %vm468 = vweird.f32 %v459
        %vm469 = vweird.f32 %v463
        %vm470 = vmor %vm468, %vm469
        %v471 = vsel %vm470, %v463, %v467
        %v472 = vand.u32 2147483647, %v459
        %vm473 = vcmp.eq.f32.partialorder %v472, 8.507059e+37
        %v474 = vand.u32 %v459, 2147483648
        %v475 = vor.u32 1.1754944e-38, %v474
        %v476 = vsel %vm473, %v475, %v471
        %v477 = vrcp.pop %v462
        %v478 = vmul.f32 %v462, %v477
        %v479 = vsub.f32 1.0, %v478
        %v480 = vmul.f32 %v477, %v479
        %v481 = vadd.f32 %v477, %v480
        %vm482 = vweird.f32 %v462
        %vm483 = vweird.f32 %v477
        %vm484 = vmor %vm482, %vm483
        %v485 = vsel %vm484, %v477, %v481
        %v486 = vand.u32 2147483647, %v462
        %vm487 = vcmp.eq.f32.partialorder %v486, 8.507059e+37
        %v488 = vand.u32 %v462, 2147483648
        %v489 = vor.u32 1.1754944e-38, %v488
        %v490 = vsel %vm487, %v489, %v485
        %v491 = vmul.f32 %v454, %v476
        %v492 = vmul.f32 %v456, %v490
        %v494 = vsel %vm444, %v491, 0
        %v497 = vsel %vm444, %v492, 0
        %499 = vmatpush.msra.mxu0 0.0
        %500 = vmatpush.msra.mxu0 0.0
        %501 = vmatpush.msra.mxu0 0.0
        %502 = vmatpush.msra.mxu0 0.0
        %503 = vmatpush.msra.mxu0 0.0
        %504 = vmatpush.msra.mxu0 0.0
        %505 = vmatpush.msra.mxu0 0.0
        %506 = vmatpush.msra.mxu0 0.0
        %507 = vmatpush.msra.mxu0 0.0
        %508 = vmatpush.msra.mxu0 0.0
        %509 = vmatpush.msra.mxu0 0.0
        %510 = vmatpush.msra.mxu0 0.0
        %511 = vmatpush.msra.mxu0 0.0
        %512 = vmatpush.msra.mxu0 0.0
        %513 = vmatpush.msra.mxu0 %v393
        %514 = vmatpush.msra.mxu0 %v392
        %515 = vmatmul.f32.gmra.mxu0 %v494
        %v516 = vpop.f32.mrf.mxu0
        %v517 = vadd.f32 0.0, %v516
        %518 = vmatmul.f32.gmra.mxu0 %v497
        %v519 = vpop.f32.mrf.mxu0
        %v520 = vadd.f32 0.0, %v519
        %521 = vdwg.mxu0
        %522 = vst.msk [vmem:[%s381] sm:$0xff] %vm444, %v491
        %523 = vst.msk [vmem:[%s381 + $0x8] sm:$0xff] %vm444, %v492
        %524 = vst.msk [vmem:[%s374] sm:$0xff] %vm398, %v517
        %525 = vst.msk [vmem:[%s374 + $0x8] sm:$0xff] %vm398, %v520
        %s526 = sand.u32 %s158, 1
        %s527 = scalar_lea.sflag [#allocation4], %s526
        %s528 = sand.u32 %s158, 1
        %s529 = smul.addr %s528, 16
        %s530 = scalar_lea.vmem [#allocation10], %s529
        %s531 = sand.u32 %s186, 1
        %s532 = scalar_lea.sflag [#allocation12], %s531
        %s533 = sand.u32 %s186, 1
        %s534 = smul.addr %s533, 16
        %s535 = scalar_lea.vmem [#allocation11], %s534
        // Predicated region
        $region53: #{tpu_custom_call.1} parent=35 // pred_check
          %p536 = pneg %p168
        $region54: #{tpu_custom_call.1} parent=35 // pred_check_branch
          %538 = sbr.rel (%p536) target = $region56
        $region55: #{tpu_custom_call.1} parent=35 // pred_region
          %s539 = smul.u32 2, %s35
          %541 = vsyncadd %s527, 0
          %s542 = smul.addr %s34, 2
          %s543 = sadd.s32 %s539, %s542
          %s544 = smul.addr %s543, 8
          %s545 = scalar_lea.hbm %s4, %s544
          %s546 = sshll.u32 %s530, 4
          %s547 = int_to_ptr.vmem [resolvable:$true] %s546
          %s548 = sshll.u32 %s545, 4
          %s549 = int_to_ptr.hbm [resolvable:$true] %s548
          %554 = dma.vmem_to_hbm [thread:$0]  %s547, 256, %s549, %s527, 128, 128, 8
        $region56: #{tpu_custom_call.1} parent=35 // pred_fallthru
          _
        // Predicated region
        $region57: #{tpu_custom_call.1} parent=35 // pred_check
          %p555 = pneg %p196
        $region58: #{tpu_custom_call.1} parent=35 // pred_check_branch
          %557 = sbr.rel (%p555) target = $region60
        $region59: #{tpu_custom_call.1} parent=35 // pred_region
          %s558 = smul.u32 2, %s35
          %560 = vsyncadd %s532, 0
          %s561 = smul.addr %s34, 2
          %s562 = sadd.s32 %s558, %s561
          %s563 = smul.addr %s562, 8
          %s564 = scalar_lea.hbm %s5, %s563
          %s565 = sshll.u32 %s535, 4
          %s566 = int_to_ptr.vmem [resolvable:$true] %s565
          %s567 = sshll.u32 %s564, 4
          %s568 = int_to_ptr.hbm [resolvable:$true] %s567
          %573 = dma.vmem_to_hbm [thread:$0]  %s566, 256, %s568, %s532, 128, 128, 8
        $region60: #{tpu_custom_call.1} parent=35 // pred_fallthru
          _
      $region36: #{tpu_custom_call.1} parent=5 // pred_fallthru
        _
      %p574 = scmp.le.s32.totalorder 2, %s25
      // Predicated region
      $region61: #{tpu_custom_call.1} parent=5 // pred_check
        %p575 = pneg %p574
      $region62: #{tpu_custom_call.1} parent=5 // pred_check_branch
        %577 = sbr.rel (%p575) target = $region64
      $region63: #{tpu_custom_call.1} parent=5 // pred_region
        %s578 = ssub.s32 %s25, 2
        // Predicated region
        $region65: #{tpu_custom_call.1} parent=63 // pred_check
          %p579 = pneg %p174
        $region66: #{tpu_custom_call.1} parent=63 // pred_check_branch
          %581 = sbr.rel (%p579) target = $region68
        $region67: #{tpu_custom_call.1} parent=63 // pred_region
          %s582 = sand.u32 %s159, 1
          %s583 = scalar_lea.sflag [#allocation4], %s582
          %s584 = sand.u32 %s159, 1
          %s585 = smul.addr %s584, 16
          %s586 = scalar_lea.vmem [#allocation10], %s585
          %588 = dma.done %s583, 256
        $region68: #{tpu_custom_call.1} parent=63 // pred_fallthru
          _
        // Predicated region
        $region69: #{tpu_custom_call.1} parent=63 // pred_check
          %p589 = pneg %p202
        $region70: #{tpu_custom_call.1} parent=63 // pred_check_branch
          %591 = sbr.rel (%p589) target = $region72
        $region71: #{tpu_custom_call.1} parent=63 // pred_region
          %s592 = sand.u32 %s187, 1
          %s593 = scalar_lea.sflag [#allocation12], %s592
          %s594 = sand.u32 %s187, 1
          %s595 = smul.addr %s594, 16
          %s596 = scalar_lea.vmem [#allocation11], %s595
          %598 = dma.done %s593, 256
        $region72: #{tpu_custom_call.1} parent=63 // pred_fallthru
          _
      $region64: #{tpu_custom_call.1} parent=5 // pred_fallthru
        _
    $region6: #{tpu_custom_call.1} parent=1 // loop_footer
      %s29 = sadd.s32 1, %s25
    $region7: #{tpu_custom_call.1} parent=1 // loop_footer_branch
      %24 = sbr.rel target = $region3
    $region8: #{tpu_custom_call.1} parent=1 // loop_exit
      _
    %599 = vsyncpa [#allocation3], 1
    %s600 = scalar_lea.sflag [#allocation3], 1
    %601 = vsyncpa %s600, 1
    %602 = vsyncpa [#allocation6], 1
    %s603 = scalar_lea.sflag [#allocation6], 1
    %604 = vsyncpa %s603, 1
    %605 = vsyncpa [#allocation9], 1
    %606 = vsyncpa [#allocation4], 1
    %s607 = scalar_lea.sflag [#allocation4], 1
    %608 = vsyncpa %s607, 1
    %609 = vsyncpa [#allocation12], 1
    %s610 = scalar_lea.sflag [#allocation12], 1
    %611 = vsyncpa %s610, 1

</llo_original>
